<compile_context>
chip_gen: v6e
topology: v6e:2x2x1
jax: 0.10.0
libtpu: 0.0.40
codegen_flags: <defaults>
</compile_context>

<pallas_src>
import functools

import jax
import jax.numpy as jnp
from jax.experimental import pallas as pl
from jax.experimental.pallas import tpu as pltpu

_PI = 3.141592653589793


# --------------------------------------------------------------------------
# Kernel
# --------------------------------------------------------------------------
def _rotate_kernel(*args, scale, half, split_inputs, precomputed_trig):
    """One batch tile: complex rotation + L2 distance reduced over features.

    Depending on static flags the refs are either
      split_inputs:  re_head, im_head, re_tail, im_tail, (r | cos, sin), out
      otherwise:     e1, e2, (r | trig), out
    All compute is f32 regardless of storage dtype.
    """
    if split_inputs:
        if precomputed_trig:
            re_h_ref, im_h_ref, re_t_ref, im_t_ref, cos_ref, sin_ref, o_ref = args
            re_rel = cos_ref[...].astype(jnp.float32)
            im_rel = sin_ref[...].astype(jnp.float32)
        else:
            re_h_ref, im_h_ref, re_t_ref, im_t_ref, r_ref, o_ref = args
            phase = r_ref[...].astype(jnp.float32) * scale
            re_rel = jnp.cos(phase)   # EUP/VALU
            im_rel = jnp.sin(phase)
        re_head = re_h_ref[...].astype(jnp.float32)
        im_head = im_h_ref[...].astype(jnp.float32)
        re_tail = re_t_ref[...].astype(jnp.float32)
        im_tail = im_t_ref[...].astype(jnp.float32)
    else:
        if precomputed_trig:
            e1_ref, e2_ref, trig_ref, o_ref = args
            trig = trig_ref[...].astype(jnp.float32)
            re_rel = trig[:, :half]
            im_rel = trig[:, half:]
        else:
            e1_ref, e2_ref, r_ref, o_ref = args
            phase = r_ref[...].astype(jnp.float32) * scale
            re_rel = jnp.cos(phase)
            im_rel = jnp.sin(phase)
        e1 = e1_ref[...].astype(jnp.float32)
        e2 = e2_ref[...].astype(jnp.float32)
        re_head, im_head = e1[:, :half], e1[:, half:]
        re_tail, im_tail = e2[:, :half], e2[:, half:]

    re_score = re_head * re_rel - im_head * im_rel - re_tail
    im_score = re_head * im_rel + im_head * re_rel - im_tail
    dist = jnp.sqrt(re_score * re_score + im_score * im_score)
    o_ref[...] = jnp.sum(dist, axis=-1, keepdims=True)


# --------------------------------------------------------------------------
# Tiling / VMEM sizing
# --------------------------------------------------------------------------
def _round_up(x, m):
    return ((x + m - 1) // m) * m


def _vmem_capacity_bytes():
    try:
        return int(pltpu.get_tpu_info().vmem_capacity_bytes)
    except Exception:
        return 64 * 1024 * 1024   # conservative fallback (v7x-sized)


def _choose_batch_tile(B, D, half, itemsize, split_inputs, precomputed_trig):
    """Padding-aware batch-tile selection + explicit scoped-VMEM limit."""
    d_pad = _round_up(D, 128)
    half_pad = _round_up(half, 128)

    if split_inputs:
        emb_lane_words = 4 * half_pad                 # re/im head + re/im tail
    else:
        emb_lane_words = 2 * d_pad                    # e1 + e2
    if precomputed_trig:
        rel_lane_words = 2 * half_pad if split_inputs else d_pad
    else:
        rel_lane_words = _round_up(half, 128)

    # Input/output block bytes per row: raw storage dtype, each stream
    # double-buffered by the Pallas pipeline; output lane-pads 1 -> 128 (f32).
    io_bytes_per_row = (emb_lane_words + rel_lane_words) * itemsize * 2 + 128 * 4 * 2
    # Conservative estimate of in-kernel f32 temporaries (upcasts, cos/sin,
    # re/im scores) that Mosaic may materialize in VMEM for large tiles.
    interm_bytes_per_row = 8 * half_pad * 4
    bytes_per_row = io_bytes_per_row + interm_bytes_per_row

    phys = _vmem_capacity_bytes()
    budget = min(24 << 20, phys // 4)                 # ~24 MiB v5e/v6e, ~16 MiB v7x

    tb = max(8, (budget // bytes_per_row) // 8 * 8)   # sublane-aligned
    tb = min(tb, 8192)                                # loose sanity cap only

    b_rows = _round_up(B, 8)
    tb = min(tb, b_rows)

    # Guarantee >=2 (ideally 4) grid steps on big batches so v7x's two
    # TensorCores both get work; keep tiles >= 512 rows (per-step overhead).
    min_rows = 512
    if b_rows >= 4 * min_rows:
        tb = min(tb, _round_up(-(-b_rows // 4), 8))
    elif b_rows >= 2 * min_rows:
        tb = min(tb, _round_up(-(-b_rows // 2), 8))

    vmem_limit = int(min(phys * 3 // 4,
                         max(2 * bytes_per_row * tb, 16 << 20) + (8 << 20)))
    return tb, vmem_limit


# --------------------------------------------------------------------------
# Wrapper
# --------------------------------------------------------------------------
def rotate_forward(e1, r, e2, *, margin, dim, feat_drop=0.0,
                   precomputed_trig=False):
    """Pallas RotatE forward.

    e1, e2: (B, D) embeddings (f32 or bf16; bf16 halves HBM bytes, compute is f32).
    r     : (B, D//2) relation phases, OR (B, D) = [cos(phase) | sin(phase)]
            when precomputed_trig=True (recommended on v7x if relations repeat).
    Returns (B,) f32 scores.
    """
    # TODO(synk): training-mode F.dropout on e1 is omitted (eval-mode identity);
    # stochastic masking would need pltpu.prng_seed/prng_random_bits + a seed arg.
    del feat_drop
    B, D = e1.shape
    half = D // 2
    assert e2.shape == (B, D)
    if precomputed_trig:
        assert r.shape == (B, D), "precomputed_trig expects [cos|sin] of shape (B, D)"
    else:
        assert r.shape == (B, half)

    rel_range = (margin + 2.0) / (dim / 2.0)
    scale = float(_PI / rel_range)

    split_inputs = (half % 128 == 0)          # re/im split via BlockSpecs
    itemsize = jnp.dtype(e1.dtype).itemsize
    tb, vmem_limit = _choose_batch_tile(B, D, half, itemsize,
                                        split_inputs, precomputed_trig)

    B_pad = _round_up(B, tb)
    if B_pad != B:
        pad = B_pad - B
        # Zero padding is harmless: cos(0)=1, sin(0)=0, zero embeddings -> score 0,
        # and the padded rows are sliced off anyway.
        e1 = jnp.pad(e1, ((0, pad), (0, 0)))
        e2 = jnp.pad(e2, ((0, pad), (0, 0)))
        r = jnp.pad(r, ((0, pad), (0, 0)))

    kernel = functools.partial(
        _rotate_kernel, scale=scale, half=half,
        split_inputs=split_inputs, precomputed_trig=precomputed_trig)

    if split_inputs:
        # Same HBM arrays passed twice; BlockSpecs pick the re / im halves, so no
        # in-kernel lane slicing and no extra HBM traffic.
        re_spec = pl.BlockSpec((tb, half), lambda i: (i, 0))
        im_spec = pl.BlockSpec((tb, half), lambda i: (i, 1))
        in_specs = [re_spec, im_spec, re_spec, im_spec]
        inputs = [e1, e1, e2, e2]
        if precomputed_trig:
            in_specs += [re_spec, im_spec]
            inputs += [r, r]
        else:
            in_specs += [pl.BlockSpec((tb, half), lambda i: (i, 0))]
            inputs += [r]
    else:
        full_spec = pl.BlockSpec((tb, D), lambda i: (i, 0))
        in_specs = [full_spec, full_spec]
        inputs = [e1, e2]
        if precomputed_trig:
            in_specs += [full_spec]
        else:
            in_specs += [pl.BlockSpec((tb, half), lambda i: (i, 0))]
        inputs += [r]

    out = pl.pallas_call(
        kernel,
        out_shape=jax.ShapeDtypeStruct((B_pad, 1), jnp.float32),
        grid=(B_pad // tb,),
        in_specs=in_specs,
        out_specs=pl.BlockSpec((tb, 1), lambda i: (i, 0)),
        compiler_params=pltpu.CompilerParams(
            dimension_semantics=("parallel",),   # megacore sharding on v7x
            vmem_limit_bytes=vmem_limit,
        ),
    )(*inputs)
    return out[:B, 0]


def rotate_reference(e1, r, e2, *, margin, dim):
    """Pure-JAX reference mirroring the PyTorch forward (eval mode)."""
    half = e1.shape[1] // 2
    rel_range = (margin + 2.0) / (dim / 2.0)
    phase = r / (rel_range / _PI)
    re_head, im_head = e1[:, :half], e1[:, half:]
    re_tail, im_tail = e2[:, :half], e2[:, half:]
    re_rel, im_rel = jnp.cos(phase), jnp.sin(phase)
    re_score = re_head * re_rel - im_head * im_rel - re_tail
    im_score = re_head * im_rel + im_head * re_rel - im_tail
    return jnp.sum(jnp.sqrt(re_score * re_score + im_score * im_score), axis=-1)


if __name__ == "__main__":
    MARGIN = 6.0
    key = jax.random.PRNGKey(0)

    def make(B, D, k):
        k1, k2, k3 = jax.random.split(k, 3)
        e1 = jax.random.normal(k1, (B, D), dtype=jnp.float32)
        e2 = jax.random.normal(k2, (B, D), dtype=jnp.float32)
        r = jax.random.uniform(k3, (B, D // 2), dtype=jnp.float32,
                               minval=-1.0, maxval=1.0)
        return e1, r, e2

    k_a, k_b = jax.random.split(key)

    # Case 1: small hidden dim (half=16 not lane-aligned -> in-kernel split path).
    B, D = 8, 32
    e1, r, e2 = make(B, D, k_a)
    out = jax.block_until_ready(rotate_forward(e1, r, e2, margin=MARGIN, dim=D))
    ref = rotate_reference(e1, r, e2, margin=MARGIN, dim=D)
    assert out.shape == (B,)
    assert jnp.allclose(out, ref, atol=1e-4, rtol=2e-5), (out, ref)

    # Case 2: half multiple of 128 -> re/im split via BlockSpec index_maps.
    B2, D2 = 16, 256
    e1b, rb, e2b = make(B2, D2, k_b)
    out2 = jax.block_until_ready(rotate_forward(e1b, rb, e2b, margin=MARGIN, dim=D2))
    ref2 = rotate_reference(e1b, rb, e2b, margin=MARGIN, dim=D2)
    assert jnp.allclose(out2, ref2, atol=1e-4, rtol=2e-5), (out2, ref2)

    # Case 3: caller-precomputed cos/sin (removes in-kernel transcendentals; v7x).
    scale = _PI / ((MARGIN + 2.0) / (D / 2.0))
    trig = jnp.concatenate([jnp.cos(r * scale), jnp.sin(r * scale)], axis=1)
    out3 = jax.block_until_ready(
        rotate_forward(e1, trig, e2, margin=MARGIN, dim=D, precomputed_trig=True))
    assert jnp.allclose(out3, ref, atol=1e-4, rtol=2e-5), (out3, ref)

    # Case 4: bf16-stored embeddings (halves HBM traffic on mem-bound v5e/v6e);
    # compute stays f32 so it matches the f32 reference on the rounded inputs.
    e1h, rh, e2h = (x.astype(jnp.bfloat16) for x in (e1, r, e2))
    out4 = jax.block_until_ready(rotate_forward(e1h, rh, e2h, margin=MARGIN, dim=D))
    ref4 = rotate_reference(e1h.astype(jnp.float32), rh.astype(jnp.float32),
                            e2h.astype(jnp.float32), margin=MARGIN, dim=D)
    assert jnp.allclose(out4, ref4, atol=1e-4, rtol=2e-5), (out4, ref4)

    print("KERNEL_OK")
</pallas_src>

<mosaic_0001>
module attributes {stable_mosaic.version = 11 : i64} {
  func.func @_rotate_kernel(%arg0: i32, %arg1: memref<8x32xf32, #tpu.memory_space<vmem>>, %arg2: memref<8x32xf32, #tpu.memory_space<vmem>>, %arg3: memref<8x16xf32, #tpu.memory_space<vmem>>, %arg4: memref<8x1xf32, #tpu.memory_space<vmem>>) attributes {dimension_semantics = [#tpu.dimension_semantics<parallel>], iteration_bounds = array<i64: 1>, scalar_prefetch = 0 : i64, scratch_operands = 0 : i64, tpu.core_type = #tpu.core_type<tc>, window_params = [{transform_indices = @transform_0, window_bounds = array<i64: 8, 32>}, {transform_indices = @transform_1, window_bounds = array<i64: 8, 32>}, {transform_indices = @transform_2, window_bounds = array<i64: 8, 16>}, {transform_indices = @transform_3, window_bounds = array<i64: 8, 1>}]} {
    %c0 = arith.constant 0 : index
    %c0_0 = arith.constant 0 : index
    %0 = vector.load %arg3[%c0, %c0_0] : memref<8x16xf32, #tpu.memory_space<vmem>>, vector<8x16xf32>
    %cst = arith.constant 6.28318548 : f32
    %1 = vector.broadcast %cst : f32 to vector<8x16xf32>
    %2 = arith.mulf %0, %1 : vector<8x16xf32>
    %3 = math.cos %2 : vector<8x16xf32>
    %4 = math.sin %2 : vector<8x16xf32>
    %c0_1 = arith.constant 0 : index
    %c0_2 = arith.constant 0 : index
    %5 = vector.load %arg1[%c0_1, %c0_2] : memref<8x32xf32, #tpu.memory_space<vmem>>, vector<8x32xf32>
    %c0_3 = arith.constant 0 : index
    %c0_4 = arith.constant 0 : index
    %6 = vector.load %arg2[%c0_3, %c0_4] : memref<8x32xf32, #tpu.memory_space<vmem>>, vector<8x32xf32>
    %7 = vector.extract_strided_slice %5 {offsets = [0, 0], sizes = [8, 16], strides = [1, 1]} : vector<8x32xf32> to vector<8x16xf32>
    %8 = vector.extract_strided_slice %5 {offsets = [0, 16], sizes = [8, 16], strides = [1, 1]} : vector<8x32xf32> to vector<8x16xf32>
    %9 = vector.extract_strided_slice %6 {offsets = [0, 0], sizes = [8, 16], strides = [1, 1]} : vector<8x32xf32> to vector<8x16xf32>
    %10 = vector.extract_strided_slice %6 {offsets = [0, 16], sizes = [8, 16], strides = [1, 1]} : vector<8x32xf32> to vector<8x16xf32>
    %11 = arith.mulf %7, %3 : vector<8x16xf32>
    %12 = arith.mulf %8, %4 : vector<8x16xf32>
    %13 = arith.subf %11, %12 : vector<8x16xf32>
    %14 = arith.subf %13, %9 : vector<8x16xf32>
    %15 = arith.mulf %7, %4 : vector<8x16xf32>
    %16 = arith.mulf %8, %3 : vector<8x16xf32>
    %17 = arith.addf %15, %16 : vector<8x16xf32>
    %18 = arith.subf %17, %10 : vector<8x16xf32>
    %19 = arith.mulf %14, %14 : vector<8x16xf32>
    %20 = arith.mulf %18, %18 : vector<8x16xf32>
    %21 = arith.addf %19, %20 : vector<8x16xf32>
    %22 = math.sqrt %21 : vector<8x16xf32>
    %cst_5 = arith.constant dense<0.000000e+00> : vector<8xf32>
    %23 = vector.multi_reduction <add>, %22, %cst_5 [1] : vector<8x16xf32> to vector<8xf32>
    %24 = vector.shape_cast %23 : vector<8xf32> to vector<8x1xf32>
    %c0_6 = arith.constant 0 : index
    %c0_7 = arith.constant 0 : index
    %25 = vector.load %arg4[%c0_6, %c0_7] : memref<8x1xf32, #tpu.memory_space<vmem>>, vector<8x1xf32>
    tpu.vector_store %arg4[%c0_6, %c0_7], %24 {strides = array<i32>} : memref<8x1xf32, #tpu.memory_space<vmem>>, vector<8x1xf32>,
    return
  }
  func.func @transform_0(%arg0: i32) -> (i32, i32) {
    %c0_i32 = arith.constant 0 : i32
    %c0_i32_0 = arith.constant 0 : i32
    return %arg0, %c0_i32 : i32, i32
  }
  func.func @transform_1(%arg0: i32) -> (i32, i32) {
    %c0_i32 = arith.constant 0 : i32
    %c0_i32_0 = arith.constant 0 : i32
    return %arg0, %c0_i32 : i32, i32
  }
  func.func @transform_2(%arg0: i32) -> (i32, i32) {
    %c0_i32 = arith.constant 0 : i32
    %c0_i32_0 = arith.constant 0 : i32
    return %arg0, %c0_i32 : i32, i32
  }
  func.func @transform_3(%arg0: i32) -> (i32, i32) {
    %c0_i32 = arith.constant 0 : i32
    %c0_i32_0 = arith.constant 0 : i32
    return %arg0, %c0_i32 : i32, i32
  }
}

</mosaic_0001>

<llo_original>
// kernel: tpu_custom_call.1
$region0: #{tpu_custom_call.1}
  #allocation0 [shape = 'u32[]', space=smem, size = 0x4, offset = 0x4, fixed_abs, tag = 'smem constant byte address 0x4 - core index']
  #allocation1 [shape = 'u32[144,128]{1,0:T(1,128)}', space=vmem, size = 0x12000, scoped, tag = 'internal scratch']
  %s0 = inlined_call_operand.hbm [shape: f32[8,32], index: 0, kind: input, shape index: {}]
  %s1 = inlined_call_operand.hbm [shape: f32[8,32], index: 1, kind: input, shape index: {}]
  %s2 = inlined_call_operand.hbm [shape: f32[8,16], index: 2, kind: input, shape index: {}]
  %s3 = inlined_call_operand.vmem [shape: f32[8,1], index: 3, kind: output, shape index: {}]
  %s4 = sld [smem:[#allocation0]]
  $region34: #{tpu_custom_call.1} parent=0
    _
  %s6 = ssub.s32 1, %s4
  %s7 = scalar_select 0, %s6, %s4
  $region1: #{tpu_custom_call.1} parent=0
    #allocation2 [shape = 'u8[4096]{0}', space=vmem, size = 0x1000, scoped, tag = 'input window, operand 0, single buffered']
    #allocation3 [shape = 's32[1]{0}', space=sflag, size = 0x4, scoped, tag = 'scoped memory for tpu_custom_call.1']
    #allocation4 [shape = 'u8[4096]{0}', space=vmem, size = 0x1000, scoped, tag = 'input window, operand 1, single buffered']
    #allocation5 [shape = 's32[1]{0}', space=sflag, size = 0x4, scoped, tag = 'scoped memory for tpu_custom_call.1']
    #allocation6 [shape = 'u8[4096]{0}', space=vmem, size = 0x1000, scoped, tag = 'input window, operand 2, single buffered']
    %8 = vsyncpa [#allocation3], 0
    %9 = vsyncpa [#allocation5], 0
    // Predicated region
    $region2: #{tpu_custom_call.1} parent=1 // pred_check
      _
    $region3: #{tpu_custom_call.1} parent=1 // pred_check_branch
      %11 = sbr.rel (0) target = $region5
    $region4: #{tpu_custom_call.1} parent=1 // pred_region
      %s13 = ssub.s32 128, 128
      %14 = vsyncadd [#allocation3], %s13
      %s16 = sshll.u32 [#allocation2], 4
      %s17 = int_to_ptr.vmem [resolvable:$true] %s16
      %19 = dma.hbm_to_vmem [thread:$0]  %s0, 128, %s17, [#allocation3]
    $region5: #{tpu_custom_call.1} parent=1 // pred_fallthru
      _
    // Predicated region
    $region6: #{tpu_custom_call.1} parent=1 // pred_check
      _
    $region7: #{tpu_custom_call.1} parent=1 // pred_check_branch
      %21 = sbr.rel (0) target = $region9
    $region8: #{tpu_custom_call.1} parent=1 // pred_region
      %s23 = ssub.s32 128, 128
      %24 = vsyncadd [#allocation5], %s23
      %s26 = sshll.u32 [#allocation4], 4
      %s27 = int_to_ptr.vmem [resolvable:$true] %s26
      %29 = dma.hbm_to_vmem [thread:$0]  %s1, 128, %s27, [#allocation5]
    $region9: #{tpu_custom_call.1} parent=1 // pred_fallthru
      _
    // Predicated region
    $region10: #{tpu_custom_call.1} parent=1 // pred_check
      _
    $region11: #{tpu_custom_call.1} parent=1 // pred_check_branch
      %31 = sbr.rel (0) target = $region13
    $region12: #{tpu_custom_call.1} parent=1 // pred_region
      %s33 = ssub.s32 128, 128
      %34 = vsyncadd [#allocation5], %s33
      %s36 = sshll.u32 [#allocation6], 4
      %s37 = int_to_ptr.vmem [resolvable:$true] %s36
      %39 = dma.hbm_to_vmem [thread:$0]  %s2, 128, %s37, [#allocation5]
    $region13: #{tpu_custom_call.1} parent=1 // pred_fallthru
      _
    // Predicated region
    $region14: #{tpu_custom_call.1} parent=1 // pred_check
      _
    $region15: #{tpu_custom_call.1} parent=1 // pred_check_branch
      %41 = sbr.rel (0) target = $region17
    $region16: #{tpu_custom_call.1} parent=1 // pred_region
      %42 = dma.done [#allocation3], 128
    $region17: #{tpu_custom_call.1} parent=1 // pred_fallthru
      _
    // Predicated region
    $region18: #{tpu_custom_call.1} parent=1 // pred_check
      _
    $region19: #{tpu_custom_call.1} parent=1 // pred_check_branch
      %44 = sbr.rel (0) target = $region21
    $region20: #{tpu_custom_call.1} parent=1 // pred_region
      %45 = dma.done [#allocation5], 128
    $region21: #{tpu_custom_call.1} parent=1 // pred_fallthru
      _
    // Predicated region
    $region22: #{tpu_custom_call.1} parent=1 // pred_check
      _
    $region23: #{tpu_custom_call.1} parent=1 // pred_check_branch
      %47 = sbr.rel (0) target = $region25
    $region24: #{tpu_custom_call.1} parent=1 // pred_region
      %48 = dma.done [#allocation5], 128
    $region25: #{tpu_custom_call.1} parent=1 // pred_fallthru
      _
    %v49 = vld [vmem:[#allocation6] sm:$0xff]
    %v50 = vmul.f32 %v49, 6.2831855
    %v51 = vand.u32 2147483647, %v50
    %vm52 = vcmp.le.f32.partialorder %v51, 0.7853982
    %vm53 = vcmp.lt.s32.totalorder %v50, 0
    %v54 = vand.u32 %v50, 2139095040
    %v55 = vshrl.u32 %v54, 23
    %v56 = vsub.s32 %v55, 127
    %v57 = vand.u32 2147483647, %v50
    %v58 = vand.u32 %v57, 8388607
    %v59 = vor.u32 %v58, 8388608
    %v60 = vsub.s32 0, %v59
    %v61 = vadd.s32 %v56, 1
    %vm62 = vcmp.gt.s32.totalorder %v61, 0
    %v63 = vsel %vm62, %v61, 0
    %v64 = vshrl.u32 %v63, 5
    %v65 = vand.u32 %v63, 31
    %v66 = vsub.s32 32, %v65
    %v67 = vshrl.u32 683565275, %v66
    %v68 = vshll.u32 683565275, %v65
    %v69 = vshrl.u32 2475754826, %v66
    %v70 = vor.u32 %v68, %v69
    %v71 = vshll.u32 2475754826, %v65
    %v72 = vshrl.u32 2131351028, %v66
    %v73 = vor.u32 %v71, %v72
    %v74 = vshll.u32 2131351028, %v65
    %v75 = vshrl.u32 2102212464, %v66
    %v76 = vor.u32 %v74, %v75
    %v77 = vshll.u32 2102212464, %v65
    %v78 = vshrl.u32 920167782, %v66
    %v79 = vor.u32 %v77, %v78
    %v80 = vshll.u32 920167782, %v65
    %v81 = vshrl.u32 1326507024, %v66
    %v82 = vor.u32 %v80, %v81
    %vm83 = vcmp.lt.s32.totalorder %v64, 1
    %vm84 = vcmp.lt.s32.totalorder %v64, 2
    %vm85 = vcmp.lt.s32.totalorder %v64, 3
    %vm86 = vcmp.lt.s32.totalorder %v64, 4
    %v87 = vsel %vm83, %v67, %v70
    %v88 = vsel %vm86, %v76, 2102212464
    %v89 = vsel %vm85, %v73, %v88
    %v90 = vsel %vm84, %v87, %v89
    %v91 = vsel %vm83, %v70, %v73
    %v92 = vsel %vm86, %v79, 920167782
    %v93 = vsel %vm85, %v76, %v92
    %v94 = vsel %vm84, %v91, %v93
    %v95 = vsel %vm83, %v73, %v76
    %v96 = vsel %vm86, %v82, 1326507024
    %v97 = vsel %vm85, %v79, %v96
    %v98 = vsel %vm84, %v95, %v97
    %v99 = vshll.u32 %v59, 8
    %v100 = vmul.u32.u64.compose %v99, %v98
    %v101 = vextract.low.u32 %v100
    %v102 = vextract.high.u32 %v100
    %v103 = vmul.u32.u64.compose %v99, %v94
    %v104 = vextract.low.u32 %v103
    %v105 = vextract.high.u32 %v103
    %v106 = vmul.u32 %v99, %v90
    %v107 = vadd.s32 %v102, %v104
    %vm108 = vc.u32 %v102, %v104
    %v109 = vadd.s32 %v105, 1
    %v110 = vsel %vm108, %v109, %v105
    %v111 = vadd.s32 %v106, %v110
    %v112 = vadd.s32 %v111, 536870912
    %v113 = vshrl.u32 %v112, 30
    %v114 = vshll.u32 %v113, 30
    %v115 = vsub.s32 %v111, %v114
    %vm116 = vcmp.lt.s32.totalorder %v115, 0
    %v117 = vsub.s32 0, %v115
    %v118 = vsel %vm116, %v117, %v115
    %v119 = vclz %v118
    %v120 = vsub.s32 %v119, 2
    %vm121 = vcmp.gt.s32.totalorder 0, %v120
    %v122 = vsel %vm121, 0, %v120
    %v123 = vsub.s32 32, %v122
    %v124 = vshll.u32 %v115, %v122
    %v125 = vshrl.u32 %v107, %v123
    %v126 = vor.u32 %v124, %v125
    %v127 = vsub.s32 4294967266, %v122
    %v128 = vadd.s32 %v127, 127
    %v129 = vshll.u32 %v128, 23
    %v130 = vor.u32 4788187, %v129
    %v131 = vand.u32 2147483647, %v130
    %v133 = vcvt.s32.f32 %v126
    %v134 = vmul.f32 %v133, %v131
    %v135 = vxor.u32 %v134, 2147483648
    %v136 = vsel %vm53, %v135, %v134
    %v137 = vsub.s32 4, %v113
    %v138 = vsel %vm53, %v137, %v113
    %v139 = vsel %vm52, %v50, %v136
    %v140 = vsel %vm52, 0, %v138
    %v141 = vcosq.f32.pop %v139
    %v142 = vsinq.f32.pop %v139
    %vm143 = vweird.f32 %v50
    %v144 = vand.u32 %v140, 3
    %vm145 = vcmp.lt.s32.totalorder %v144, 2
    %vm146 = vcmp.eq.s32.totalorder %v144, 0
    %v147 = vxor.u32 %v142, 2147483648
    %v148 = vsel %vm146, %v141, %v147
    %vm149 = vcmp.eq.s32.totalorder %v144, 2
    %v150 = vxor.u32 %v141, 2147483648
    %v151 = vsel %vm149, %v150, %v142
    %v152 = vsel %vm145, %v148, %v151
    %v153 = vsel %vm143, nan, %v152
    %v154 = vand.u32 2147483647, %v50
    %vm155 = vcmp.le.f32.partialorder %v154, 0.7853982
    %vm156 = vcmp.lt.s32.totalorder %v50, 0
    %v157 = vand.u32 %v50, 2139095040
    %v158 = vshrl.u32 %v157, 23
    %v159 = vsub.s32 %v158, 127
    %v160 = vand.u32 2147483647, %v50
    %v161 = vand.u32 %v160, 8388607
    %v162 = vor.u32 %v161, 8388608
    %v163 = vsub.s32 0, %v162
    %v164 = vadd.s32 %v159, 1
    %vm165 = vcmp.gt.s32.totalorder %v164, 0
    %v166 = vsel %vm165, %v164, 0
    %v167 = vshrl.u32 %v166, 5
    %v168 = vand.u32 %v166, 31
    %v169 = vsub.s32 32, %v168
    %v170 = vshrl.u32 683565275, %v169
    %v171 = vshll.u32 683565275, %v168
    %v172 = vshrl.u32 2475754826, %v169
    %v173 = vor.u32 %v171, %v172
    %v174 = vshll.u32 2475754826, %v168
    %v175 = vshrl.u32 2131351028, %v169
    %v176 = vor.u32 %v174, %v175
    %v177 = vshll.u32 2131351028, %v168
    %v178 = vshrl.u32 2102212464, %v169
    %v179 = vor.u32 %v177, %v178
    %v180 = vshll.u32 2102212464, %v168
    %v181 = vshrl.u32 920167782, %v169
    %v182 = vor.u32 %v180, %v181
    %v183 = vshll.u32 920167782, %v168
    %v184 = vshrl.u32 1326507024, %v169
    %v185 = vor.u32 %v183, %v184
    %vm186 = vcmp.lt.s32.totalorder %v167, 1
    %vm187 = vcmp.lt.s32.totalorder %v167, 2
    %vm188 = vcmp.lt.s32.totalorder %v167, 3
    %vm189 = vcmp.lt.s32.totalorder %v167, 4
    %v190 = vsel %vm186, %v170, %v173
    %v191 = vsel %vm189, %v179, 2102212464
    %v192 = vsel %vm188, %v176, %v191
    %v193 = vsel %vm187, %v190, %v192
    %v194 = vsel %vm186, %v173, %v176
    %v195 = vsel %vm189, %v182, 920167782
    %v196 = vsel %vm188, %v179, %v195
    %v197 = vsel %vm187, %v194, %v196
    %v198 = vsel %vm186, %v176, %v179
    %v199 = vsel %vm189, %v185, 1326507024
    %v200 = vsel %vm188, %v182, %v199
    %v201 = vsel %vm187, %v198, %v200
    %v202 = vshll.u32 %v162, 8
    %v203 = vmul.u32.u64.compose %v202, %v201
    %v204 = vextract.low.u32 %v203
    %v205 = vextract.high.u32 %v203
    %v206 = vmul.u32.u64.compose %v202, %v197
    %v207 = vextract.low.u32 %v206
    %v208 = vextract.high.u32 %v206
    %v209 = vmul.u32 %v202, %v193
    %v210 = vadd.s32 %v205, %v207
    %vm211 = vc.u32 %v205, %v207
    %v212 = vadd.s32 %v208, 1
    %v213 = vsel %vm211, %v212, %v208
    %v214 = vadd.s32 %v209, %v213
    %v215 = vadd.s32 %v214, 536870912
    %v216 = vshrl.u32 %v215, 30
    %v217 = vshll.u32 %v216, 30
    %v218 = vsub.s32 %v214, %v217
    %vm219 = vcmp.lt.s32.totalorder %v218, 0
    %v220 = vsub.s32 0, %v218
    %v221 = vsel %vm219, %v220, %v218
    %v222 = vclz %v221
    %v223 = vsub.s32 %v222, 2
    %vm224 = vcmp.gt.s32.totalorder 0, %v223
    %v225 = vsel %vm224, 0, %v223
    %v226 = vsub.s32 32, %v225
    %v227 = vshll.u32 %v218, %v225
    %v228 = vshrl.u32 %v210, %v226
    %v229 = vor.u32 %v227, %v228
    %v230 = vsub.s32 4294967266, %v225
    %v231 = vadd.s32 %v230, 127
    %v232 = vshll.u32 %v231, 23
    %v233 = vor.u32 4788187, %v232
    %v234 = vand.u32 2147483647, %v233
    %v236 = vcvt.s32.f32 %v229
    %v237 = vmul.f32 %v236, %v234
    %v238 = vxor.u32 %v237, 2147483648
    %v239 = vsel %vm156, %v238, %v237
    %v240 = vsub.s32 4, %v216
    %v241 = vsel %vm156, %v240, %v216
    %v242 = vsel %vm155, %v50, %v239
    %v243 = vsel %vm155, 0, %v241
    %v244 = vcosq.f32.pop %v242
    %v245 = vsinq.f32.pop %v242
    %vm246 = vweird.f32 %v50
    %v247 = vadd.s32 %v243, 3
    %v248 = vand.u32 %v247, 3
    %vm249 = vcmp.lt.s32.totalorder %v248, 2
    %vm250 = vcmp.eq.s32.totalorder %v248, 0
    %v251 = vxor.u32 %v245, 2147483648
    %v252 = vsel %vm250, %v244, %v251
    %vm253 = vcmp.eq.s32.totalorder %v248, 2
    %v254 = vxor.u32 %v244, 2147483648
    %v255 = vsel %vm253, %v254, %v245
    %v256 = vsel %vm249, %v252, %v255
    %v257 = vsel %vm246, nan, %v256
    %v258 = vld [vmem:[#allocation2] sm:$0xff]
    %v259 = vld [vmem:[#allocation4] sm:$0xff]
    %v260 = vmul.f32 %v258, %v153
    %262 = vrot.lane.b32.xlu0 %v257, 16
    %v263 = vpop.permute.xlu0 %262
    %v265 = vmul.f32 %v258, %v263
    %267 = vrot.lane.b32.xlu0 %v265, 112
    %v268 = vpop.permute.xlu0 %267
    %v270 = vsub.f32 %v260, %v268
    %v271 = vsub.f32 %v270, %v259
    %v272 = vmul.f32 %v258, %v257
    %274 = vrot.lane.b32.xlu0 %v153, 16
    %v275 = vpop.permute.xlu0 %274
    %v277 = vmul.f32 %v258, %v275
    %279 = vrot.lane.b32.xlu0 %v277, 112
    %v280 = vpop.permute.xlu0 %279
    %v282 = vadd.f32 %v272, %v280
    %284 = vrot.lane.b32.xlu0 %v259, 112
    %v285 = vpop.permute.xlu0 %284
    %v287 = vsub.f32 %v282, %v285
    %v288 = vmul.f32 %v271, %v271
    %v289 = vmul.f32 %v287, %v287
    %v290 = vadd.f32 %v288, %v289
    %v291 = vrsqrt.pop %v290
    %v292 = vmul.f32 %v290, %v291
    %vm293 = vcmp.eq.f32.partialorder %v290, inf
    %v294 = vsel %vm293, %v290, %v292
    %vm295 = vcmp.eq.f32.partialorder %v290, 0.0
    %v296 = vand.u32 %v290, 2147483648
    %v297 = vsel %vm295, %v296, %v294
    %vm298 = vcmask 130048
    %v299 = vsel %vm298, %v297, 0.0
    %300 = vadd.xlane.f32.xlu0 %v299
    %v301 = vpop.xlane.xlu0 %300
    %vm302 = vcmask 7168
    %303 = vst.msk [vmem:[%s3] sm:$0xff] %vm302, %v301
    // Predicated region
    $region26: #{tpu_custom_call.1} parent=1 // pred_check
      _
    $region27: #{tpu_custom_call.1} parent=1 // pred_check_branch
      %305 = sbr.rel (0) target = $region29
    $region28: #{tpu_custom_call.1} parent=1 // pred_region
      _
    $region29: #{tpu_custom_call.1} parent=1 // pred_fallthru
      _
    // Predicated region
    $region30: #{tpu_custom_call.1} parent=1 // pred_check
      _
    $region31: #{tpu_custom_call.1} parent=1 // pred_check_branch
      %307 = sbr.rel (0) target = $region33
    $region32: #{tpu_custom_call.1} parent=1 // pred_region
      _
    $region33: #{tpu_custom_call.1} parent=1 // pred_fallthru
      _
    %308 = vsyncpa [#allocation3], 1
    %309 = vsyncpa [#allocation5], 1

</llo_original>
